<compile_context>
chip_gen: v6e
topology: v6e:2x2x1
jax: 0.10.0
libtpu: 0.0.40
codegen_flags: <defaults>
</compile_context>

<pallas_src>
import functools

import jax
import jax.numpy as jnp
from jax.experimental import pallas as pl
from jax.experimental.pallas import tpu as pltpu


def user_embedding_kernel(x_ref, w1_ref, b1_ref, w2_ref, b2_ref,
                          w3_ref, b3_ref, o_ref):
    # x_ref : (tb, input_size)   f32
    # w1    : (input_size, hidden), b1: (1, hidden)   [biases always f32]
    # w2    : (hidden, hidden),     b2: (1, hidden)
    # w3    : (hidden, out_size),   b3: (1, out_size)
    x = x_ref[...]
    if x.dtype != w1_ref.dtype:
        # in-kernel cast to the MXU feed dtype (VPU op, hidden under the x DMA)
        x = x.astype(w1_ref.dtype)

    h1 = jnp.dot(x, w1_ref[...], preferred_element_type=jnp.float32) + b1_ref[...]
    h1 = jnp.tanh(h1)                      # f32 on EUP; dropout1 = identity (eval)

    h2 = jnp.dot(h1.astype(w2_ref.dtype), w2_ref[...],
                 preferred_element_type=jnp.float32) + b2_ref[...]
    h2 = jnp.tanh(h2)                      # f32; dropout2 = identity (eval)

    out = jnp.dot(h2.astype(w3_ref.dtype), w3_ref[...],
                  preferred_element_type=jnp.float32) + b3_ref[...]
    o_ref[...] = out.astype(o_ref.dtype)   # single contiguous (tb, out_sz) store


def _cdiv(a, b):
    return -(-a // b)


def _round_up(v, m):
    return ((v + m - 1) // m) * m


@functools.partial(jax.jit, static_argnames=("tb", "use_bf16", "min_grid_steps"))
def user_embedding_forward(x, params, *, tb=512, use_bf16=False, min_grid_steps=2):
    """x: [B, input_size] float32. params: dict of w1,b1,w2,b2,w3,b3 (weights [in, out])."""
    B, in_sz = x.shape
    hid = params["w1"].shape[1]
    out_sz = params["w3"].shape[1]

    w1, b1 = params["w1"], params["b1"]
    w2, b2 = params["w2"], params["b2"]
    w3, b3 = params["w3"], params["b3"]

    # Optional bf16 MXU feed: only the weights are cast here (halves weight DMA);
    # x is cast inside the kernel, biases + tanh stay f32.
    if use_bf16:
        w1 = w1.astype(jnp.bfloat16)
        w2 = w2.astype(jnp.bfloat16)
        w3 = w3.astype(jnp.bfloat16)

    # ---- batch tiling: balanced tiles; >= min_grid_steps steps for v7x megacore ----
    n_tiles = max(_cdiv(B, tb), 1)
    if n_tiles < min_grid_steps and B >= 8 * min_grid_steps:
        n_tiles = min_grid_steps
    tb_eff = max(_round_up(_cdiv(B, n_tiles), 8), 8)   # sublane-aligned
    grid_b = _cdiv(B, tb_eff)
    B_pad = grid_b * tb_eff
    if B_pad != B:
        x = jnp.pad(x, ((0, B_pad - B), (0, 0)))

    # ---- VMEM budget from actual buffers (double-buffered tiles, weights 1x or 2x) ----
    w_bytes_per = 2 if use_bf16 else 4
    x_tile_bytes = tb_eff * in_sz * 4
    o_tile_bytes = tb_eff * out_sz * 4
    weight_bytes = (in_sz * hid + hid * hid + hid * out_sz) * w_bytes_per \
                   + (2 * hid + out_sz) * 4
    big_weights = weight_bytes > (4 << 20)
    w_buf_count = 1 if big_weights else 2
    needed = 2 * (x_tile_bytes + o_tile_bytes) + w_buf_count * weight_bytes
    vmem_limit = int(min(max(2 * needed + (8 << 20), 16 << 20), 48 << 20))

    # weights/biases are grid-invariant -> block index (0, 0); single-buffer them
    # (pl.Buffered(1)) once they are large enough to threaten VMEM on v7x.
    w_kwargs = {"pipeline_mode": pl.Buffered(1)} if big_weights else {}

    def full(shape):
        return pl.BlockSpec(shape, lambda i: (0, 0), **w_kwargs)

    out = pl.pallas_call(
        user_embedding_kernel,
        out_shape=jax.ShapeDtypeStruct((B_pad, out_sz), jnp.float32),
        grid_spec=pltpu.PrefetchScalarGridSpec(
            num_scalar_prefetch=0,
            grid=(grid_b,),
            in_specs=[
                pl.BlockSpec((tb_eff, in_sz), lambda i: (i, 0)),   # x tile (batch)
                full((in_sz, hid)),                                # w1
                full((1, hid)),                                    # b1 (f32)
                full((hid, hid)),                                  # w2
                full((1, hid)),                                    # b2 (f32)
                full((hid, out_sz)),                               # w3
                full((1, out_sz)),                                 # b3 (f32)
            ],
            out_specs=pl.BlockSpec((tb_eff, out_sz), lambda i: (i, 0)),
        ),
        compiler_params=pltpu.CompilerParams(
            dimension_semantics=("parallel",),       # batch axis shards across TCs
            vmem_limit_bytes=vmem_limit,
        ),
    )(x, w1, b1, w2, b2, w3, b3)

    if B_pad != B:
        out = out[:B]
    return out


def init_params(key, input_size, hidden_size, output_size):
    """nn.Linear-style init (uniform +/- 1/sqrt(fan_in)); weights stored [in, out]."""
    k1, k2, k3, k4, k5, k6 = jax.random.split(key, 6)

    def lin(kw, kb, fan_in, fan_out):
        bound = 1.0 / jnp.sqrt(fan_in)
        w = jax.random.uniform(kw, (fan_in, fan_out), jnp.float32, -bound, bound)
        b = jax.random.uniform(kb, (1, fan_out), jnp.float32, -bound, bound)
        return w, b

    w1, b1 = lin(k1, k2, input_size, hidden_size)
    w2, b2 = lin(k3, k4, hidden_size, hidden_size)
    w3, b3 = lin(k5, k6, hidden_size, output_size)
    return {"w1": w1, "b1": b1, "w2": w2, "b2": b2, "w3": w3, "b3": b3}


def reference_forward(x, p):
    h1 = jnp.tanh(x @ p["w1"] + p["b1"])
    h2 = jnp.tanh(h1 @ p["w2"] + p["b2"])
    return h2 @ p["w3"] + p["b3"]


if __name__ == "__main__":
    key = jax.random.PRNGKey(0)
    kx, kp = jax.random.split(key)

    # small shapes consistent with the module
    B, input_size, hidden_size, output_size = 64, 32, 32, 16
    x = jax.random.normal(kx, (B, input_size), jnp.float32)
    params = init_params(kp, input_size, hidden_size, output_size)

    # default f32 path (2 grid steps even at this small B -> both TCs on v7x)
    out = jax.block_until_ready(user_embedding_forward(x, params))
    ref = reference_forward(x, params)
    assert out.shape == (B, output_size)
    assert jnp.allclose(out, ref, atol=1e-4, rtol=1e-4), \
        float(jnp.max(jnp.abs(out - ref)))

    # ragged batch (B not divisible by the tile or by 8)
    xr = jax.random.normal(kx, (37, input_size), jnp.float32)
    outr = jax.block_until_ready(user_embedding_forward(xr, params))
    assert outr.shape == (37, output_size)
    assert jnp.allclose(outr, reference_forward(xr, params), atol=1e-4, rtol=1e-4)

    # bf16-weights path (in-kernel x cast); looser tolerance, different numerics
    outb = jax.block_until_ready(user_embedding_forward(x, params, use_bf16=True))
    assert outb.shape == (B, output_size)
    assert bool(jnp.all(jnp.isfinite(outb)))
    assert jnp.allclose(outb, ref, atol=5e-2, rtol=5e-2)

    print("KERNEL_OK")
</pallas_src>

<mosaic_0001>
module attributes {stable_mosaic.version = 11 : i64} {
  func.func @user_embedding_kernel(%arg0: i32, %arg1: memref<32x32xf32, #tpu.memory_space<vmem>>, %arg2: memref<32x32xf32, #tpu.memory_space<vmem>>, %arg3: memref<1x32xf32, #tpu.memory_space<vmem>>, %arg4: memref<32x32xf32, #tpu.memory_space<vmem>>, %arg5: memref<1x32xf32, #tpu.memory_space<vmem>>, %arg6: memref<32x16xf32, #tpu.memory_space<vmem>>, %arg7: memref<1x16xf32, #tpu.memory_space<vmem>>, %arg8: memref<32x16xf32, #tpu.memory_space<vmem>>) attributes {dimension_semantics = [#tpu.dimension_semantics<parallel>], iteration_bounds = array<i64: 2>, scalar_prefetch = 0 : i64, scratch_operands = 0 : i64, tpu.core_type = #tpu.core_type<tc>, window_params = [{transform_indices = @transform_0, window_bounds = array<i64: 32, 32>}, {pipeline_mode = #tpu.pipeline_mode<synchronous>, transform_indices = @transform_1, window_bounds = array<i64: 32, 32>}, {pipeline_mode = #tpu.pipeline_mode<synchronous>, transform_indices = @transform_2, window_bounds = array<i64: 1, 32>}, {pipeline_mode = #tpu.pipeline_mode<synchronous>, transform_indices = @transform_3, window_bounds = array<i64: 32, 32>}, {pipeline_mode = #tpu.pipeline_mode<synchronous>, transform_indices = @transform_4, window_bounds = array<i64: 1, 32>}, {pipeline_mode = #tpu.pipeline_mode<synchronous>, transform_indices = @transform_5, window_bounds = array<i64: 32, 16>}, {pipeline_mode = #tpu.pipeline_mode<synchronous>, transform_indices = @transform_6, window_bounds = array<i64: 1, 16>}, {transform_indices = @transform_7, window_bounds = array<i64: 32, 16>}]} {
    %c0 = arith.constant 0 : index
    %c0_0 = arith.constant 0 : index
    %0 = vector.load %arg1[%c0, %c0_0] : memref<32x32xf32, #tpu.memory_space<vmem>>, vector<32x32xf32>
    %c0_1 = arith.constant 0 : index
    %c0_2 = arith.constant 0 : index
    %1 = vector.load %arg2[%c0_1, %c0_2] : memref<32x32xf32, #tpu.memory_space<vmem>>, vector<32x32xf32>
    %cst = arith.constant dense<0.000000e+00> : vector<32x32xf32>
    %2 = tpu.matmul %0, %1, %cst {dimension_numbers = #tpu.dot_dimension_numbers<[1], [0], [0], [1], [0, 0, 1, 1], [], []>} : vector<32x32xf32>, vector<32x32xf32>, vector<32x32xf32> -> vector<32x32xf32>
    %c0_3 = arith.constant 0 : index
    %c0_4 = arith.constant 0 : index
    %3 = vector.load %arg3[%c0_3, %c0_4] : memref<1x32xf32, #tpu.memory_space<vmem>>, vector<1x32xf32>
    %4 = vector.broadcast %3 : vector<1x32xf32> to vector<32x32xf32>
    %5 = arith.addf %2, %4 : vector<32x32xf32>
    %6 = math.tanh %5 : vector<32x32xf32>
    %c0_5 = arith.constant 0 : index
    %c0_6 = arith.constant 0 : index
    %7 = vector.load %arg4[%c0_5, %c0_6] : memref<32x32xf32, #tpu.memory_space<vmem>>, vector<32x32xf32>
    %cst_7 = arith.constant dense<0.000000e+00> : vector<32x32xf32>
    %8 = tpu.matmul %6, %7, %cst_7 {dimension_numbers = #tpu.dot_dimension_numbers<[1], [0], [0], [1], [0, 0, 1, 1], [], []>} : vector<32x32xf32>, vector<32x32xf32>, vector<32x32xf32> -> vector<32x32xf32>
    %c0_8 = arith.constant 0 : index
    %c0_9 = arith.constant 0 : index
    %9 = vector.load %arg5[%c0_8, %c0_9] : memref<1x32xf32, #tpu.memory_space<vmem>>, vector<1x32xf32>
    %10 = vector.broadcast %9 : vector<1x32xf32> to vector<32x32xf32>
    %11 = arith.addf %8, %10 : vector<32x32xf32>
    %12 = math.tanh %11 : vector<32x32xf32>
    %c0_10 = arith.constant 0 : index
    %c0_11 = arith.constant 0 : index
    %13 = vector.load %arg6[%c0_10, %c0_11] : memref<32x16xf32, #tpu.memory_space<vmem>>, vector<32x16xf32>
    %cst_12 = arith.constant dense<0.000000e+00> : vector<32x16xf32>
    %14 = tpu.matmul %12, %13, %cst_12 {dimension_numbers = #tpu.dot_dimension_numbers<[1], [0], [0], [1], [0, 0, 1, 1], [], []>} : vector<32x32xf32>, vector<32x16xf32>, vector<32x16xf32> -> vector<32x16xf32>
    %c0_13 = arith.constant 0 : index
    %c0_14 = arith.constant 0 : index
    %15 = vector.load %arg7[%c0_13, %c0_14] : memref<1x16xf32, #tpu.memory_space<vmem>>, vector<1x16xf32>
    %16 = vector.broadcast %15 : vector<1x16xf32> to vector<32x16xf32>
    %17 = arith.addf %14, %16 : vector<32x16xf32>
    %c0_15 = arith.constant 0 : index
    %c0_16 = arith.constant 0 : index
    %18 = vector.load %arg8[%c0_15, %c0_16] : memref<32x16xf32, #tpu.memory_space<vmem>>, vector<32x16xf32>
    tpu.vector_store %arg8[%c0_15, %c0_16], %17 {strides = array<i32>} : memref<32x16xf32, #tpu.memory_space<vmem>>, vector<32x16xf32>,
    return
  }
  func.func @transform_0(%arg0: i32) -> (i32, i32) {
    %c0_i32 = arith.constant 0 : i32
    %c0_i32_0 = arith.constant 0 : i32
    return %arg0, %c0_i32 : i32, i32
  }
  func.func @transform_1(%arg0: i32) -> (i32, i32) {
    %c0_i32 = arith.constant 0 : i32
    %c0_i32_0 = arith.constant 0 : i32
    %c0_i32_1 = arith.constant 0 : i32
    return %c0_i32, %c0_i32_0 : i32, i32
  }
  func.func @transform_2(%arg0: i32) -> (i32, i32) {
    %c0_i32 = arith.constant 0 : i32
    %c0_i32_0 = arith.constant 0 : i32
    %c0_i32_1 = arith.constant 0 : i32
    return %c0_i32, %c0_i32_0 : i32, i32
  }
  func.func @transform_3(%arg0: i32) -> (i32, i32) {
    %c0_i32 = arith.constant 0 : i32
    %c0_i32_0 = arith.constant 0 : i32
    %c0_i32_1 = arith.constant 0 : i32
    return %c0_i32, %c0_i32_0 : i32, i32
  }
  func.func @transform_4(%arg0: i32) -> (i32, i32) {
    %c0_i32 = arith.constant 0 : i32
    %c0_i32_0 = arith.constant 0 : i32
    %c0_i32_1 = arith.constant 0 : i32
    return %c0_i32, %c0_i32_0 : i32, i32
  }
  func.func @transform_5(%arg0: i32) -> (i32, i32) {
    %c0_i32 = arith.constant 0 : i32
    %c0_i32_0 = arith.constant 0 : i32
    %c0_i32_1 = arith.constant 0 : i32
    return %c0_i32, %c0_i32_0 : i32, i32
  }
  func.func @transform_6(%arg0: i32) -> (i32, i32) {
    %c0_i32 = arith.constant 0 : i32
    %c0_i32_0 = arith.constant 0 : i32
    %c0_i32_1 = arith.constant 0 : i32
    return %c0_i32, %c0_i32_0 : i32, i32
  }
  func.func @transform_7(%arg0: i32) -> (i32, i32) {
    %c0_i32 = arith.constant 0 : i32
    %c0_i32_0 = arith.constant 0 : i32
    return %arg0, %c0_i32 : i32, i32
  }
}

</mosaic_0001>

<llo_original>
// kernel: user_embedding_forward.1
$region0: #{user_embedding_forward.1}
  #allocation0 [shape = 'u32[]', space=smem, size = 0x4, offset = 0x4, fixed_abs, tag = 'smem constant byte address 0x4 - core index']
  #allocation1 [shape = 'u32[144,128]{1,0:T(1,128)}', space=vmem, size = 0x12000, scoped, tag = 'internal scratch']
  %s0 = inlined_call_operand.vmem [shape: f32[64,32], index: 0, kind: input, shape index: {}]
  %s1 = inlined_call_operand.vmem [shape: f32[32,32], index: 1, kind: input, shape index: {}]
  %s2 = inlined_call_operand.vmem [shape: f32[1,32], index: 2, kind: input, shape index: {}]
  %s3 = inlined_call_operand.vmem [shape: f32[32,32], index: 3, kind: input, shape index: {}]
  %s4 = inlined_call_operand.vmem [shape: f32[1,32], index: 4, kind: input, shape index: {}]
  %s5 = inlined_call_operand.vmem [shape: f32[32,16], index: 5, kind: input, shape index: {}]
  %s6 = inlined_call_operand.vmem [shape: f32[1,16], index: 6, kind: input, shape index: {}]
  %s7 = inlined_call_operand.vmem [shape: f32[64,16], index: 7, kind: output, shape index: {}]
  %s8 = sld [smem:[#allocation0]]
  $region61: #{user_embedding_forward.1} parent=0
    _
  %s10 = ssub.s32 1, %s8
  %s11 = scalar_select 0, %s10, %s8
  loop: start=0, step=1, limit=4
  $region2: #{user_embedding_forward.1} parent=0 // loop_pre_header
    _
  $region3: #{user_embedding_forward.1} parent=0 // loop_header
    %s13 = sphi 0, %s17
    %p14 = scmp.ge.s32.totalorder %s13, 4
    %s23 = sphi 0, %s25
    %s26 = sphi 0, %s23
    %s27 = sphi 0, %s26
    %s43 = sphi 0, %s27
    %s47 = sphi 0, %s47
    %s49 = sphi 0, %s47
    %s50 = sphi 0, %s49
    %s64 = sphi 0, %s50
    %s68 = sphi 0, %s68
    %s70 = sphi 0, %s68
    %s71 = sphi 0, %s70
    %s85 = sphi 0, %s71
    %s89 = sphi 0, %s89
    %s91 = sphi 0, %s89
    %s92 = sphi 0, %s91
    %s106 = sphi 0, %s92
    %s110 = sphi 0, %s110
    %s112 = sphi 0, %s110
    %s113 = sphi 0, %s112
    %s127 = sphi 0, %s113
    %s131 = sphi 0, %s131
    %s133 = sphi 0, %s131
    %s134 = sphi 0, %s133
    %s148 = sphi 0, %s134
    %s152 = sphi 0, %s152
    %s154 = sphi 0, %s152
    %s155 = sphi 0, %s154
    %s169 = sphi 0, %s155
    %s175 = sphi 0, %s177
    %s178 = sphi 0, %s175
    %s179 = sphi 0, %s178
    %s195 = sphi 0, %s179
  $region4: #{user_embedding_forward.1} parent=0 // loop_header_branch
    %16 = sbr.rel (%p14) target = $region8
  $region5: #{user_embedding_forward.1} parent=0 // loop_body
    %s18 = ssub.s32 %s13, 1
    %s19 = ssub.s32 %s13, 2
    %s20 = sadd.s32 %s13, 1
    %s21 = ssub.s32 %s13, %s20
    %p22 = scmp.eq.s32.totalorder %s21, 0
    %s24 = sadd.s32 %s23, 1
    %s25 = scalar_select %p22, %s23, %s24
    %p28 = pneg %p22
    %p29 = scmp.eq.s32.totalorder %s13, 1
    %p30 = por %p28, %p29
    %p31 = scmp.ne.s32.totalorder %s23, %s26
    %p32 = scmp.eq.s32.totalorder %s13, 0
    %p33 = por %p31, %p32
    %p34 = scmp.ne.s32.totalorder %s23, %s26
    %p35 = scmp.eq.s32.totalorder %s18, 1
    %p36 = por %p34, %p35
    %p37 = scmp.ne.s32.totalorder %s26, %s27
    %p38 = scmp.eq.s32.totalorder %s18, 0
    %p39 = por %p37, %p38
    %p40 = scmp.ne.s32.totalorder %s26, %s27
    %p41 = scmp.eq.s32.totalorder %s19, 1
    %p42 = por %p40, %p41
    %p44 = scmp.ne.s32.totalorder %s27, %s43
    %p45 = scmp.eq.s32.totalorder %s19, 0
    %p46 = por %p44, %p45
    %s48 = sadd.s32 %s47, 1
    %p51 = scmp.eq.s32.totalorder %s13, 1
    %p52 = scmp.ne.s32.totalorder %s47, %s49
    %p53 = scmp.eq.s32.totalorder %s13, 0
    %p54 = por %p52, %p53
    %p55 = scmp.ne.s32.totalorder %s47, %s49
    %p56 = scmp.eq.s32.totalorder %s18, 1
    %p57 = por %p55, %p56
    %p58 = scmp.ne.s32.totalorder %s49, %s50
    %p59 = scmp.eq.s32.totalorder %s18, 0
    %p60 = por %p58, %p59
    %p61 = scmp.ne.s32.totalorder %s49, %s50
    %p62 = scmp.eq.s32.totalorder %s19, 1
    %p63 = por %p61, %p62
    %p65 = scmp.ne.s32.totalorder %s50, %s64
    %p66 = scmp.eq.s32.totalorder %s19, 0
    %p67 = por %p65, %p66
    %s69 = sadd.s32 %s68, 1
    %p72 = scmp.eq.s32.totalorder %s13, 1
    %p73 = scmp.ne.s32.totalorder %s68, %s70
    %p74 = scmp.eq.s32.totalorder %s13, 0
    %p75 = por %p73, %p74
    %p76 = scmp.ne.s32.totalorder %s68, %s70
    %p77 = scmp.eq.s32.totalorder %s18, 1
    %p78 = por %p76, %p77
    %p79 = scmp.ne.s32.totalorder %s70, %s71
    %p80 = scmp.eq.s32.totalorder %s18, 0
    %p81 = por %p79, %p80
    %p82 = scmp.ne.s32.totalorder %s70, %s71
    %p83 = scmp.eq.s32.totalorder %s19, 1
    %p84 = por %p82, %p83
    %p86 = scmp.ne.s32.totalorder %s71, %s85
    %p87 = scmp.eq.s32.totalorder %s19, 0
    %p88 = por %p86, %p87
    %s90 = sadd.s32 %s89, 1
    %p93 = scmp.eq.s32.totalorder %s13, 1
    %p94 = scmp.ne.s32.totalorder %s89, %s91
    %p95 = scmp.eq.s32.totalorder %s13, 0
    %p96 = por %p94, %p95
    %p97 = scmp.ne.s32.totalorder %s89, %s91
    %p98 = scmp.eq.s32.totalorder %s18, 1
    %p99 = por %p97, %p98
    %p100 = scmp.ne.s32.totalorder %s91, %s92
    %p101 = scmp.eq.s32.totalorder %s18, 0
    %p102 = por %p100, %p101
    %p103 = scmp.ne.s32.totalorder %s91, %s92
    %p104 = scmp.eq.s32.totalorder %s19, 1
    %p105 = por %p103, %p104
    %p107 = scmp.ne.s32.totalorder %s92, %s106
    %p108 = scmp.eq.s32.totalorder %s19, 0
    %p109 = por %p107, %p108
    %s111 = sadd.s32 %s110, 1
    %p114 = scmp.eq.s32.totalorder %s13, 1
    %p115 = scmp.ne.s32.totalorder %s110, %s112
    %p116 = scmp.eq.s32.totalorder %s13, 0
    %p117 = por %p115, %p116
    %p118 = scmp.ne.s32.totalorder %s110, %s112
    %p119 = scmp.eq.s32.totalorder %s18, 1
    %p120 = por %p118, %p119
    %p121 = scmp.ne.s32.totalorder %s112, %s113
    %p122 = scmp.eq.s32.totalorder %s18, 0
    %p123 = por %p121, %p122
    %p124 = scmp.ne.s32.totalorder %s112, %s113
    %p125 = scmp.eq.s32.totalorder %s19, 1
    %p126 = por %p124, %p125
    %p128 = scmp.ne.s32.totalorder %s113, %s127
    %p129 = scmp.eq.s32.totalorder %s19, 0
    %p130 = por %p128, %p129
    %s132 = sadd.s32 %s131, 1
    %p135 = scmp.eq.s32.totalorder %s13, 1
    %p136 = scmp.ne.s32.totalorder %s131, %s133
    %p137 = scmp.eq.s32.totalorder %s13, 0
    %p138 = por %p136, %p137
    %p139 = scmp.ne.s32.totalorder %s131, %s133
    %p140 = scmp.eq.s32.totalorder %s18, 1
    %p141 = por %p139, %p140
    %p142 = scmp.ne.s32.totalorder %s133, %s134
    %p143 = scmp.eq.s32.totalorder %s18, 0
    %p144 = por %p142, %p143
    %p145 = scmp.ne.s32.totalorder %s133, %s134
    %p146 = scmp.eq.s32.totalorder %s19, 1
    %p147 = por %p145, %p146
    %p149 = scmp.ne.s32.totalorder %s134, %s148
    %p150 = scmp.eq.s32.totalorder %s19, 0
    %p151 = por %p149, %p150
    %s153 = sadd.s32 %s152, 1
    %p156 = scmp.eq.s32.totalorder %s13, 1
    %p157 = scmp.ne.s32.totalorder %s152, %s154
    %p158 = scmp.eq.s32.totalorder %s13, 0
    %p159 = por %p157, %p158
    %p160 = scmp.ne.s32.totalorder %s152, %s154
    %p161 = scmp.eq.s32.totalorder %s18, 1
    %p162 = por %p160, %p161
    %p163 = scmp.ne.s32.totalorder %s154, %s155
    %p164 = scmp.eq.s32.totalorder %s18, 0
    %p165 = por %p163, %p164
    %p166 = scmp.ne.s32.totalorder %s154, %s155
    %p167 = scmp.eq.s32.totalorder %s19, 1
    %p168 = por %p166, %p167
    %p170 = scmp.ne.s32.totalorder %s155, %s169
    %p171 = scmp.eq.s32.totalorder %s19, 0
    %p172 = por %p170, %p171
    %s173 = ssub.s32 %s13, %s20
    %p174 = scmp.eq.s32.totalorder %s173, 0
    %s176 = sadd.s32 %s175, 1
    %s177 = scalar_select %p174, %s175, %s176
    %p180 = pneg %p174
    %p181 = scmp.eq.s32.totalorder %s13, 1
    %p182 = por %p180, %p181
    %p183 = scmp.ne.s32.totalorder %s175, %s178
    %p184 = scmp.eq.s32.totalorder %s13, 0
    %p185 = por %p183, %p184
    %p186 = scmp.ne.s32.totalorder %s175, %s178
    %p187 = scmp.eq.s32.totalorder %s18, 1
    %p188 = por %p186, %p187
    %p189 = scmp.ne.s32.totalorder %s178, %s179
    %p190 = scmp.eq.s32.totalorder %s18, 0
    %p191 = por %p189, %p190
    %p192 = scmp.ne.s32.totalorder %s178, %s179
    %p193 = scmp.eq.s32.totalorder %s19, 1
    %p194 = por %p192, %p193
    %p196 = scmp.ne.s32.totalorder %s179, %s195
    %p197 = scmp.eq.s32.totalorder %s19, 0
    %p198 = por %p196, %p197
    %p199 = scmp.le.s32.totalorder 1, %s13
    %p200 = scmp.lt.s32.totalorder %s13, 3
    %p201 = pnand %p199, %p200
    %p202 = pneg %p201
    // Predicated region
    $region9: #{user_embedding_forward.1} parent=5 // pred_check
      _
    $region10: #{user_embedding_forward.1} parent=5 // pred_check_branch
      %204 = sbr.rel (%p201) target = $region12
    $region11: #{user_embedding_forward.1} parent=5 // pred_region
      %s205 = ssub.s32 %s13, 1
      // Predicated region
      $region13: #{user_embedding_forward.1} parent=11 // pred_check
        %p206 = pneg %p60
      $region14: #{user_embedding_forward.1} parent=11 // pred_check_branch
        %208 = sbr.rel (%p206) target = $region16
      $region15: #{user_embedding_forward.1} parent=11 // pred_region
        _
      $region16: #{user_embedding_forward.1} parent=11 // pred_fallthru
        _
      // Predicated region
      $region17: #{user_embedding_forward.1} parent=11 // pred_check
        %p209 = pneg %p81
      $region18: #{user_embedding_forward.1} parent=11 // pred_check_branch
        %211 = sbr.rel (%p209) target = $region20
      $region19: #{user_embedding_forward.1} parent=11 // pred_region
        _
      $region20: #{user_embedding_forward.1} parent=11 // pred_fallthru
        _
      // Predicated region
      $region21: #{user_embedding_forward.1} parent=11 // pred_check
        %p212 = pneg %p102
      $region22: #{user_embedding_forward.1} parent=11 // pred_check_branch
        %214 = sbr.rel (%p212) target = $region24
      $region23: #{user_embedding_forward.1} parent=11 // pred_region
        _
      $region24: #{user_embedding_forward.1} parent=11 // pred_fallthru
        _
      // Predicated region
      $region25: #{user_embedding_forward.1} parent=11 // pred_check
        %p215 = pneg %p123
      $region26: #{user_embedding_forward.1} parent=11 // pred_check_branch
        %217 = sbr.rel (%p215) target = $region28
      $region27: #{user_embedding_forward.1} parent=11 // pred_region
        _
      $region28: #{user_embedding_forward.1} parent=11 // pred_fallthru
        _
      // Predicated region
      $region29: #{user_embedding_forward.1} parent=11 // pred_check
        %p218 = pneg %p144
      $region30: #{user_embedding_forward.1} parent=11 // pred_check_branch
        %220 = sbr.rel (%p218) target = $region32
      $region31: #{user_embedding_forward.1} parent=11 // pred_region
        _
      $region32: #{user_embedding_forward.1} parent=11 // pred_fallthru
        _
      // Predicated region
      $region33: #{user_embedding_forward.1} parent=11 // pred_check
        %p221 = pneg %p165
      $region34: #{user_embedding_forward.1} parent=11 // pred_check_branch
        %223 = sbr.rel (%p221) target = $region36
      $region35: #{user_embedding_forward.1} parent=11 // pred_region
        _
      $region36: #{user_embedding_forward.1} parent=11 // pred_fallthru
        _
    $region12: #{user_embedding_forward.1} parent=5 // pred_fallthru
      _
    %p224 = scmp.lt.s32.totalorder %s13, 2
    // Predicated region
    $region37: #{user_embedding_forward.1} parent=5 // pred_check
      %p225 = pneg %p224
    $region38: #{user_embedding_forward.1} parent=5 // pred_check_branch
      %227 = sbr.rel (%p225) target = $region40
    $region39: #{user_embedding_forward.1} parent=5 // pred_region
      // Predicated region
      $region41: #{user_embedding_forward.1} parent=39 // pred_check
        %p228 = pneg %p33
      $region42: #{user_embedding_forward.1} parent=39 // pred_check_branch
        %230 = sbr.rel (%p228) target = $region44
      $region43: #{user_embedding_forward.1} parent=39 // pred_region
        %s231 = smul.u32 4, %s13
        %p232 = scmp.lt.s32.totalorder %s231, 7
        %s233 = scalar_select %p232, %s231, 7
        %s234 = smul.addr %s233, 8
        %s235 = scalar_lea.vmem %s0, %s234
        %s236 = smul.u32 4, %s13
      $region44: #{user_embedding_forward.1} parent=39 // pred_fallthru
        _
    $region40: #{user_embedding_forward.1} parent=5 // pred_fallthru
      _
    %p237 = scmp.le.s32.totalorder 1, %s13
    %p238 = scmp.lt.s32.totalorder %s13, 3
    %p239 = pnand %p237, %p238
    %p240 = pneg %p239
    // Predicated region
    $region45: #{user_embedding_forward.1} parent=5 // pred_check
      _
    $region46: #{user_embedding_forward.1} parent=5 // pred_check_branch
      %242 = sbr.rel (%p239) target = $region48
    $region47: #{user_embedding_forward.1} parent=5 // pred_region
      %s243 = ssub.s32 %s13, 1
      %s244 = smul.u32 4, %s18
      %p245 = scmp.lt.s32.totalorder %s244, 7
      %s246 = scalar_select %p245, %s244, 7
      %s247 = smul.addr %s246, 8
      %s248 = scalar_lea.vmem %s0, %s247
      %p249 = pneg %p39
      %p250 = pneg %p36
      %p251 = pneg %p60
      %p252 = pneg %p57
      %p253 = pneg %p81
      %p254 = pneg %p78
      %p255 = pneg %p102
      %p256 = pneg %p99
      %p257 = pneg %p123
      %p258 = pneg %p120
      %p259 = pneg %p144
      %p260 = pneg %p141
      %p261 = pneg %p165
      %p262 = pneg %p162
      %p263 = pneg %p191
      %p264 = pneg %p188
      %s265 = smul.u32 4, %s18
      %p266 = scmp.lt.s32.totalorder %s265, 7
      %s267 = scalar_select %p266, %s265, 7
      %s268 = smul.addr %s267, 8
      %s269 = scalar_lea.vmem %s7, %s268
      %s270 = smul.u32 4, %s18
      %p271 = scmp.lt.s32.totalorder %s270, 7
      %s272 = scalar_select %p271, %s270, 7
      %s273 = smul.addr %s272, 8
      %s274 = scalar_lea.vmem %s0, %s273
      %s275 = smul.u32 4, %s18
      %s276 = smul.u32 4, %s18
      %p277 = scmp.lt.s32.totalorder %s276, 7
      %s278 = scalar_select %p277, %s276, 7
      %s279 = smul.addr %s278, 8
      %s280 = scalar_lea.vmem %s7, %s279
      %s281 = smul.u32 4, %s18
      %v282 = vld [vmem:[%s274] sm:$0xff]
      %v283 = vld [vmem:[%s274 + $0x8] sm:$0xff]
      %v284 = vld [vmem:[%s274 + $0x10] sm:$0xff]
      %v285 = vld [vmem:[%s274 + $0x18] sm:$0xff]
      %v286 = vld [vmem:[%s1] sm:$0xff]
      %v287 = vld [vmem:[%s1 + $0x8] sm:$0xff]
      %v288 = vld [vmem:[%s1 + $0x10] sm:$0xff]
      %v289 = vld [vmem:[%s1 + $0x18] sm:$0xff]
      %v290 = vld [vmem:[%s2] sm:$0x1]
      %v292 = vlaneseq
      %v293 = vshrl.u32 %v292, 7
      %v294 = vsub.s32 0, %v293
      %v295 = vrot.slane %v290, %v294
      %vm297 = vcmask 261120
      %v299 = vsel %vm297, %v282, 0
      %v302 = vsel %vm297, %v283, 0
      %v305 = vsel %vm297, %v284, 0
      %v308 = vsel %vm297, %v285, 0
      %310 = vmatprep.subr.mxu0 0.0
      %311 = vmatpush1.msra.mxu0 0.0
      %312 = vmatprep.subr.mxu0 0.0
      %313 = vmatpush1.msra.mxu0 0.0
      %314 = vmatprep.subr.mxu0 0.0
      %315 = vmatpush1.msra.mxu0 0.0
      %316 = vmatprep.subr.mxu0 0.0
      %317 = vmatpush1.msra.mxu0 0.0
      %318 = vmatprep.subr.mxu0 0.0
      %319 = vmatpush1.msra.mxu0 0.0
      %320 = vmatprep.subr.mxu0 0.0
      %321 = vmatpush1.msra.mxu0 0.0
      %322 = vmatprep.subr.mxu0 0.0
      %323 = vmatpush1.msra.mxu0 0.0
      %324 = vmatprep.subr.mxu0 0.0
      %325 = vmatpush1.msra.mxu0 0.0
      %326 = vmatprep.subr.mxu0 0.0
      %327 = vmatpush1.msra.mxu0 0.0
      %328 = vmatprep.subr.mxu0 0.0
      %329 = vmatpush1.msra.mxu0 0.0
      %330 = vmatprep.subr.mxu0 0.0
      %331 = vmatpush1.msra.mxu0 0.0
      %332 = vmatprep.subr.mxu0 0.0
      %333 = vmatpush1.msra.mxu0 0.0
      %334 = vmatprep.subr.mxu0 0.0
      %335 = vmatpush1.msra.mxu0 %v289
      %336 = vmatprep.subr.mxu0 0.0
      %337 = vmatpush1.msra.mxu0 %v288
      %338 = vmatprep.subr.mxu0 0.0
      %339 = vmatpush1.msra.mxu0 %v287
      %340 = vmatprep.subr.mxu0 0.0
      %341 = vmatpush1.msra.mxu0 %v286
      %342 = vmatprep.subr.mxu0 0.0
      %343 = vmatpush2.msra.mxu0 0.0
      %344 = vmatprep.subr.mxu0 0.0
      %345 = vmatpush2.msra.mxu0 0.0
      %346 = vmatprep.subr.mxu0 0.0
      %347 = vmatpush2.msra.mxu0 0.0
      %348 = vmatprep.subr.mxu0 0.0
      %349 = vmatpush2.msra.mxu0 0.0
      %350 = vmatprep.subr.mxu0 0.0
      %351 = vmatpush2.msra.mxu0 0.0
      %352 = vmatprep.subr.mxu0 0.0
      %353 = vmatpush2.msra.mxu0 0.0
      %354 = vmatprep.subr.mxu0 0.0
      %355 = vmatpush2.msra.mxu0 0.0
      %356 = vmatprep.subr.mxu0 0.0
      %357 = vmatpush2.msra.mxu0 0.0
      %358 = vmatprep.subr.mxu0 0.0
      %359 = vmatpush2.msra.mxu0 0.0
      %360 = vmatprep.subr.mxu0 0.0
      %361 = vmatpush2.msra.mxu0 0.0
      %362 = vmatprep.subr.mxu0 0.0
      %363 = vmatpush2.msra.mxu0 0.0
      %364 = vmatprep.subr.mxu0 0.0
      %365 = vmatpush2.msra.mxu0 0.0
      %366 = vmatprep.subr.mxu0 0.0
      %367 = vmatpush2.msra.mxu0 0.0
      %368 = vmatprep.subr.mxu0 0.0
      %369 = vmatpush2.msra.mxu0 0.0
      %370 = vmatprep.subr.mxu0 0.0
      %371 = vmatpush2.msra.mxu0 0.0
      %372 = vmatprep.subr.mxu0 0.0
      %373 = vmatpush2.msra.mxu0 0.0
      %374 = vmatprep.mubr.f32.mxu0 0.0
      %375 = vmatmul.mubr.f32.gmra.mxu0 %v299
      %v376 = vpop.f32.mrf.mxu0
      %v377 = vadd.f32 %v295, %v376
      %v378 = vpop.f32.mrf.mxu0
      %379 = vmatprep.mubr.f32.mxu0 0.0
      %380 = vmatmul.mubr.f32.gmra.mxu0 %v302
      %v381 = vpop.f32.mrf.mxu0
      %v382 = vadd.f32 %v295, %v381
      %v383 = vpop.f32.mrf.mxu0
      %384 = vmatprep.mubr.f32.mxu0 0.0
      %385 = vmatmul.mubr.f32.gmra.mxu0 %v305
      %v386 = vpop.f32.mrf.mxu0
      %v387 = vadd.f32 %v295, %v386
      %v388 = vpop.f32.mrf.mxu0
      %389 = vmatprep.mubr.f32.mxu0 0.0
      %390 = vmatmul.mubr.f32.gmra.mxu0 %v308
      %v391 = vpop.f32.mrf.mxu0
      %v392 = vadd.f32 %v295, %v391
      %v393 = vpop.f32.mrf.mxu0
      %394 = vdwg.mxu0
      %v395 = vtanh.pop %v377
      %v396 = vtanh.pop %v382
      %v397 = vtanh.pop %v387
      %v398 = vtanh.pop %v392
      %v399 = vld [vmem:[%s3] sm:$0xff]
      %v400 = vld [vmem:[%s3 + $0x8] sm:$0xff]
      %v401 = vld [vmem:[%s3 + $0x10] sm:$0xff]
      %v402 = vld [vmem:[%s3 + $0x18] sm:$0xff]
      %v403 = vld [vmem:[%s4] sm:$0x1]
      %v405 = vlaneseq
      %v406 = vshrl.u32 %v405, 7
      %v407 = vsub.s32 0, %v406
      %v408 = vrot.slane %v403, %v407
      %v411 = vsel %vm297, %v395, 0
      %v414 = vsel %vm297, %v396, 0
      %v417 = vsel %vm297, %v397, 0
      %v420 = vsel %vm297, %v398, 0
      %422 = vmatprep.subr.mxu0 0.0
      %423 = vmatpush1.msra.mxu0 0.0
      %424 = vmatprep.subr.mxu0 0.0
      %425 = vmatpush1.msra.mxu0 0.0
      %426 = vmatprep.subr.mxu0 0.0
      %427 = vmatpush1.msra.mxu0 0.0
      %428 = vmatprep.subr.mxu0 0.0
      %429 = vmatpush1.msra.mxu0 0.0
      %430 = vmatprep.subr.mxu0 0.0
      %431 = vmatpush1.msra.mxu0 0.0
      %432 = vmatprep.subr.mxu0 0.0
      %433 = vmatpush1.msra.mxu0 0.0
      %434 = vmatprep.subr.mxu0 0.0
      %435 = vmatpush1.msra.mxu0 0.0
      %436 = vmatprep.subr.mxu0 0.0
      %437 = vmatpush1.msra.mxu0 0.0
      %438 = vmatprep.subr.mxu0 0.0
      %439 = vmatpush1.msra.mxu0 0.0
      %440 = vmatprep.subr.mxu0 0.0
      %441 = vmatpush1.msra.mxu0 0.0
      %442 = vmatprep.subr.mxu0 0.0
      %443 = vmatpush1.msra.mxu0 0.0
      %444 = vmatprep.subr.mxu0 0.0
      %445 = vmatpush1.msra.mxu0 0.0
      %446 = vmatprep.subr.mxu0 0.0
      %447 = vmatpush1.msra.mxu0 %v402
      %448 = vmatprep.subr.mxu0 0.0
      %449 = vmatpush1.msra.mxu0 %v401
      %450 = vmatprep.subr.mxu0 0.0
      %451 = vmatpush1.msra.mxu0 %v400
      %452 = vmatprep.subr.mxu0 0.0
      %453 = vmatpush1.msra.mxu0 %v399
      %454 = vmatprep.subr.mxu0 0.0
      %455 = vmatpush2.msra.mxu0 0.0
      %456 = vmatprep.subr.mxu0 0.0
      %457 = vmatpush2.msra.mxu0 0.0
      %458 = vmatprep.subr.mxu0 0.0
      %459 = vmatpush2.msra.mxu0 0.0
      %460 = vmatprep.subr.mxu0 0.0
      %461 = vmatpush2.msra.mxu0 0.0
      %462 = vmatprep.subr.mxu0 0.0
      %463 = vmatpush2.msra.mxu0 0.0
      %464 = vmatprep.subr.mxu0 0.0
      %465 = vmatpush2.msra.mxu0 0.0
      %466 = vmatprep.subr.mxu0 0.0
      %467 = vmatpush2.msra.mxu0 0.0
      %468 = vmatprep.subr.mxu0 0.0
      %469 = vmatpush2.msra.mxu0 0.0
      %470 = vmatprep.subr.mxu0 0.0
      %471 = vmatpush2.msra.mxu0 0.0
      %472 = vmatprep.subr.mxu0 0.0
      %473 = vmatpush2.msra.mxu0 0.0
      %474 = vmatprep.subr.mxu0 0.0
      %475 = vmatpush2.msra.mxu0 0.0
      %476 = vmatprep.subr.mxu0 0.0
      %477 = vmatpush2.msra.mxu0 0.0
      %478 = vmatprep.subr.mxu0 0.0
      %479 = vmatpush2.msra.mxu0 0.0
      %480 = vmatprep.subr.mxu0 0.0
      %481 = vmatpush2.msra.mxu0 0.0
      %482 = vmatprep.subr.mxu0 0.0
      %483 = vmatpush2.msra.mxu0 0.0
      %484 = vmatprep.subr.mxu0 0.0
      %485 = vmatpush2.msra.mxu0 0.0
      %486 = vmatprep.mubr.f32.mxu0 0.0
      %487 = vmatmul.mubr.f32.gmra.mxu0 %v411
      %v488 = vpop.f32.mrf.mxu0
      %v489 = vadd.f32 %v408, %v488
      %v490 = vpop.f32.mrf.mxu0
      %491 = vmatprep.mubr.f32.mxu0 0.0
      %492 = vmatmul.mubr.f32.gmra.mxu0 %v414
      %v493 = vpop.f32.mrf.mxu0
      %v494 = vadd.f32 %v408, %v493
      %v495 = vpop.f32.mrf.mxu0
      %496 = vmatprep.mubr.f32.mxu0 0.0
      %497 = vmatmul.mubr.f32.gmra.mxu0 %v417
      %v498 = vpop.f32.mrf.mxu0
      %v499 = vadd.f32 %v408, %v498
      %v500 = vpop.f32.mrf.mxu0
      %501 = vmatprep.mubr.f32.mxu0 0.0
      %502 = vmatmul.mubr.f32.gmra.mxu0 %v420
      %v503 = vpop.f32.mrf.mxu0
      %v504 = vadd.f32 %v408, %v503
      %v505 = vpop.f32.mrf.mxu0
      %506 = vdwg.mxu0
      %v507 = vtanh.pop %v489
      %v508 = vtanh.pop %v494
      %v509 = vtanh.pop %v499
      %v510 = vtanh.pop %v504
      %v511 = vld [vmem:[%s5] sm:$0xff]
      %v512 = vld [vmem:[%s5 + $0x8] sm:$0xff]
      %v513 = vld [vmem:[%s5 + $0x10] sm:$0xff]
      %v514 = vld [vmem:[%s5 + $0x18] sm:$0xff]
      %v515 = vld [vmem:[%s6] sm:$0x1]
      %v517 = vlaneseq
      %v518 = vshrl.u32 %v517, 7
      %v519 = vsub.s32 0, %v518
      %v520 = vrot.slane %v515, %v519
      %v523 = vsel %vm297, %v507, 0
      %v526 = vsel %vm297, %v508, 0
      %v529 = vsel %vm297, %v509, 0
      %v532 = vsel %vm297, %v510, 0
      %534 = vmatprep.subr.mxu0 0.0
      %535 = vmatpush1.msra.mxu0 0.0
      %536 = vmatprep.subr.mxu0 0.0
      %537 = vmatpush1.msra.mxu0 0.0
      %538 = vmatprep.subr.mxu0 0.0
      %539 = vmatpush1.msra.mxu0 0.0
      %540 = vmatprep.subr.mxu0 0.0
      %541 = vmatpush1.msra.mxu0 0.0
      %542 = vmatprep.subr.mxu0 0.0
      %543 = vmatpush1.msra.mxu0 0.0
      %544 = vmatprep.subr.mxu0 0.0
      %545 = vmatpush1.msra.mxu0 0.0
      %546 = vmatprep.subr.mxu0 0.0
      %547 = vmatpush1.msra.mxu0 0.0
      %548 = vmatprep.subr.mxu0 0.0
      %549 = vmatpush1.msra.mxu0 0.0
      %550 = vmatprep.subr.mxu0 0.0
      %551 = vmatpush1.msra.mxu0 0.0
      %552 = vmatprep.subr.mxu0 0.0
      %553 = vmatpush1.msra.mxu0 0.0
      %554 = vmatprep.subr.mxu0 0.0
      %555 = vmatpush1.msra.mxu0 0.0
      %556 = vmatprep.subr.mxu0 0.0
      %557 = vmatpush1.msra.mxu0 0.0
      %558 = vmatprep.subr.mxu0 0.0
      %559 = vmatpush1.msra.mxu0 %v514
      %560 = vmatprep.subr.mxu0 0.0
      %561 = vmatpush1.msra.mxu0 %v513
      %562 = vmatprep.subr.mxu0 0.0
      %563 = vmatpush1.msra.mxu0 %v512
      %564 = vmatprep.subr.mxu0 0.0
      %565 = vmatpush1.msra.mxu0 %v511
      %566 = vmatprep.subr.mxu0 0.0
      %567 = vmatpush2.msra.mxu0 0.0
      %568 = vmatprep.subr.mxu0 0.0
      %569 = vmatpush2.msra.mxu0 0.0
      %570 = vmatprep.subr.mxu0 0.0
      %571 = vmatpush2.msra.mxu0 0.0
      %572 = vmatprep.subr.mxu0 0.0
      %573 = vmatpush2.msra.mxu0 0.0
      %574 = vmatprep.subr.mxu0 0.0
      %575 = vmatpush2.msra.mxu0 0.0
      %576 = vmatprep.subr.mxu0 0.0
      %577 = vmatpush2.msra.mxu0 0.0
      %578 = vmatprep.subr.mxu0 0.0
      %579 = vmatpush2.msra.mxu0 0.0
      %580 = vmatprep.subr.mxu0 0.0
      %581 = vmatpush2.msra.mxu0 0.0
      %582 = vmatprep.subr.mxu0 0.0
      %583 = vmatpush2.msra.mxu0 0.0
      %584 = vmatprep.subr.mxu0 0.0
      %585 = vmatpush2.msra.mxu0 0.0
      %586 = vmatprep.subr.mxu0 0.0
      %587 = vmatpush2.msra.mxu0 0.0
      %588 = vmatprep.subr.mxu0 0.0
      %589 = vmatpush2.msra.mxu0 0.0
      %590 = vmatprep.subr.mxu0 0.0
      %591 = vmatpush2.msra.mxu0 0.0
      %592 = vmatprep.subr.mxu0 0.0
      %593 = vmatpush2.msra.mxu0 0.0
      %594 = vmatprep.subr.mxu0 0.0
      %595 = vmatpush2.msra.mxu0 0.0
      %596 = vmatprep.subr.mxu0 0.0
      %597 = vmatpush2.msra.mxu0 0.0
      %598 = vmatprep.mubr.f32.mxu0 0.0
      %599 = vmatmul.mubr.f32.gmra.mxu0 %v523
      %v600 = vpop.f32.mrf.mxu0
      %v601 = vadd.f32 %v520, %v600
      %v602 = vpop.f32.mrf.mxu0
      %603 = vmatprep.mubr.f32.mxu0 0.0
      %604 = vmatmul.mubr.f32.gmra.mxu0 %v526
      %v605 = vpop.f32.mrf.mxu0
      %v606 = vadd.f32 %v520, %v605
      %v607 = vpop.f32.mrf.mxu0
      %608 = vmatprep.mubr.f32.mxu0 0.0
      %609 = vmatmul.mubr.f32.gmra.mxu0 %v529
      %v610 = vpop.f32.mrf.mxu0
      %v611 = vadd.f32 %v520, %v610
      %v612 = vpop.f32.mrf.mxu0
      %613 = vmatprep.mubr.f32.mxu0 0.0
      %614 = vmatmul.mubr.f32.gmra.mxu0 %v532
      %v615 = vpop.f32.mrf.mxu0
      %v616 = vadd.f32 %v520, %v615
      %v617 = vpop.f32.mrf.mxu0
      %618 = vdwg.mxu0
      %vm619 = vcmask 130048
      %620 = vst.msk [vmem:[%s280] sm:$0xff] %vm619, %v601
      %621 = vst.msk [vmem:[%s280 + $0x8] sm:$0xff] %vm619, %v606
      %622 = vst.msk [vmem:[%s280 + $0x10] sm:$0xff] %vm619, %v611
      %623 = vst.msk [vmem:[%s280 + $0x18] sm:$0xff] %vm619, %v616
      %s624 = smul.u32 4, %s18
      %p625 = scmp.lt.s32.totalorder %s624, 7
      %s626 = scalar_select %p625, %s624, 7
      %s627 = smul.addr %s626, 8
      %s628 = scalar_lea.vmem %s7, %s627
      // Predicated region
      $region49: #{user_embedding_forward.1} parent=47 // pred_check
        %p629 = pneg %p188
      $region50: #{user_embedding_forward.1} parent=47 // pred_check_branch
        %631 = sbr.rel (%p629) target = $region52
      $region51: #{user_embedding_forward.1} parent=47 // pred_region
        %s632 = smul.u32 4, %s18
      $region52: #{user_embedding_forward.1} parent=47 // pred_fallthru
        _
    $region48: #{user_embedding_forward.1} parent=5 // pred_fallthru
      _
    %p633 = scmp.le.s32.totalorder 2, %s13
    // Predicated region
    $region53: #{user_embedding_forward.1} parent=5 // pred_check
      %p634 = pneg %p633
    $region54: #{user_embedding_forward.1} parent=5 // pred_check_branch
      %636 = sbr.rel (%p634) target = $region56
    $region55: #{user_embedding_forward.1} parent=5 // pred_region
      %s637 = ssub.s32 %s13, 2
      // Predicated region
      $region57: #{user_embedding_forward.1} parent=55 // pred_check
        %p638 = pneg %p194
      $region58: #{user_embedding_forward.1} parent=55 // pred_check_branch
        %640 = sbr.rel (%p638) target = $region60
      $region59: #{user_embedding_forward.1} parent=55 // pred_region
        %s641 = smul.u32 4, %s19
        %p642 = scmp.lt.s32.totalorder %s641, 7
        %s643 = scalar_select %p642, %s641, 7
        %s644 = smul.addr %s643, 8
        %s645 = scalar_lea.vmem %s7, %s644
      $region60: #{user_embedding_forward.1} parent=55 // pred_fallthru
        _
    $region56: #{user_embedding_forward.1} parent=5 // pred_fallthru
      _
  $region6: #{user_embedding_forward.1} parent=0 // loop_footer
    %s17 = sadd.s32 1, %s13
  $region7: #{user_embedding_forward.1} parent=0 // loop_footer_branch
    %12 = sbr.rel target = $region3
  $region8: #{user_embedding_forward.1} parent=0 // loop_exit
    _

</llo_original>
